<compile_context>
chip_gen: v5e
topology: v5e:2x2
jax: 0.10.0
libtpu: 0.0.40
codegen_flags: <defaults>
</compile_context>

<pallas_src>
from collections import namedtuple

import jax
import jax.numpy as jnp
from jax.experimental import pallas as pl
from jax.experimental.pallas import tpu as pltpu


Time2VecParams = namedtuple(
    "Time2VecParams",
    ["w_big", "b_big", "mask", "in_features", "out_features", "rows_packed"],
)


def _t2v_cos_kernel(tau_ref, w_ref, b_ref, mask_ref, o_ref):
    # z = tau_packed @ W_big + b_big ; single MXU matmul, f32 accumulation.
    z = jnp.dot(tau_ref[...], w_ref[...], preferred_element_type=jnp.float32)
    z = z + b_ref[...]                      # (1, R*out) bias broadcasts over rows
    # Resident periodic mask: 1.0 on the cos columns, 0.0 on each linear column.
    cos_cols = mask_ref[...] != 0.0         # (1, R*out) -> broadcasts over rows
    o_ref[...] = jnp.where(cos_cols, jnp.cos(z), z).astype(o_ref.dtype)


def fuse_params(w, b, w0, b0, *, rows_packed=8):
    """Fuse (w, b, w0, b0) into lane-packed block-diagonal params.

    Do this ONCE at module-init time, not on every forward call.

    Returns Time2VecParams with:
      w_big [R*in, R*out]  block-diagonal with R copies of [w | w0]
      b_big [1, R*out]     R copies of [b | b0]
      mask  [1, R*out]     1.0 where cos is applied (periodic: col % out != out-1)
    """
    w = jnp.asarray(w, jnp.float32)
    w0 = jnp.asarray(w0, jnp.float32)
    b = jnp.asarray(b, jnp.float32).reshape(-1)
    b0 = jnp.asarray(b0, jnp.float32).reshape(-1)

    w_full = jnp.concatenate([w, w0], axis=-1)          # [in, out]
    b_full = jnp.concatenate([b, b0], axis=-1)          # [out]
    in_f, out_f = w_full.shape
    r = int(rows_packed)

    eye = jnp.eye(r, dtype=w_full.dtype)
    # w_big[s*in + i, t*out + o] = (s == t) * w_full[i, o]
    w_big = jnp.einsum("st,io->sito", eye, w_full).reshape(r * in_f, r * out_f)
    b_big = jnp.tile(b_full, (r,)).reshape(1, r * out_f)

    mask_1 = jnp.concatenate(
        [jnp.ones((out_f - 1,), jnp.float32), jnp.zeros((1,), jnp.float32)]
    )
    mask = jnp.tile(mask_1, (r,)).reshape(1, r * out_f)

    return Time2VecParams(w_big, b_big, mask, in_f, out_f, r)


def cosine_activation_fused(tau, params, *, block_rows=16384):
    """Pallas CosineActivation forward with pre-fused (lane-packed) params.

    tau: [B, in_features] float32 -> [B, out_features] float32.
    block_rows is in ORIGINAL rows; per-step double-buffered VMEM is roughly
    2 * block_rows * (in+out) * 4 bytes (~6 MiB at the default), safe on all
    TPU generations without a vmem_limit override.
    """
    r = params.rows_packed
    in_f = params.in_features
    out_f = params.out_features
    B = tau.shape[0]
    assert tau.shape[1] == in_f, (tau.shape, in_f)

    # Lane-packing needs B % R == 0; pad by at most R-1 rows (cheap; the large
    # row-tile raggedness is handled by Pallas via pl.cdiv, no full-tile pad).
    b_pad = ((B + r - 1) // r) * r
    if b_pad != B:
        tau = jnp.pad(tau, ((0, b_pad - B), (0, 0)))
    bp = b_pad // r                                   # packed rows
    tau_p = tau.reshape(bp, r * in_f)                 # free row-major view

    # Packed-row tile: multiple of 8 sublanes, sized from block_rows.
    tm = max(8, (block_rows // r // 8) * 8)
    if bp <= tm:
        tm = bp                                       # single full block (always legal)
        grid = (1,)
    else:
        grid = (pl.cdiv(bp, tm),)                     # ragged last block handled by Pallas

    out_p = pl.pallas_call(
        _t2v_cos_kernel,
        out_shape=jax.ShapeDtypeStruct((bp, r * out_f), tau.dtype),
        grid_spec=pltpu.PrefetchScalarGridSpec(
            num_scalar_prefetch=0,
            grid=grid,
            in_specs=[
                # tau: streamed packed-row tile by tile (pipelined DMA).
                pl.BlockSpec((tm, r * in_f), lambda i: (i, 0)),
                # weights / bias / mask: same block every step -> resident in VMEM.
                pl.BlockSpec((r * in_f, r * out_f), lambda i: (0, 0)),
                pl.BlockSpec((1, r * out_f), lambda i: (0, 0)),
                pl.BlockSpec((1, r * out_f), lambda i: (0, 0)),
            ],
            out_specs=pl.BlockSpec((tm, r * out_f), lambda i: (i, 0)),
        ),
        compiler_params=pltpu.CompilerParams(
            # Batch tiles are independent -> shard across TCs on v7x.
            dimension_semantics=("parallel",)
        ),
    )(tau_p, params.w_big, params.b_big, params.mask)

    out = out_p.reshape(b_pad, out_f)                 # free row-major view
    return out[:B] if b_pad != B else out


def cosine_activation(tau, w, b, w0, b0, *, block_rows=16384, rows_packed=8):
    """Drop-in equivalent of CosineActivation.forward (fuses params per call).

    For production, call fuse_params() once at init and reuse
    cosine_activation_fused() per step.
    """
    params = fuse_params(w, b, w0, b0, rows_packed=rows_packed)
    return cosine_activation_fused(tau, params, block_rows=block_rows)


if __name__ == "__main__":
    # Small, deterministic setup consistent with the module's __init__.
    in_features = 32
    out_features = 16
    batch = 8

    key = jax.random.PRNGKey(0)
    k_tau, k_w, k_b, k_w0, k_b0 = jax.random.split(key, 5)

    tau = jax.random.normal(k_tau, (batch, in_features), dtype=jnp.float32)
    w = jax.random.normal(k_w, (in_features, out_features - 1), dtype=jnp.float32)
    b = jax.random.normal(k_b, (out_features - 1,), dtype=jnp.float32)
    w0 = jax.random.normal(k_w0, (in_features, 1), dtype=jnp.float32)
    b0 = jax.random.normal(k_b0, (1,), dtype=jnp.float32)

    def ref_fn(t):
        hp = jax.lax.Precision.HIGHEST
        v1 = jnp.cos(jnp.dot(t, w, precision=hp) + b)
        v2 = jnp.dot(t, w0, precision=hp) + b0
        return jnp.concatenate([v1, v2], axis=-1)

    # Fuse parameters once (module-init time), then call the kernel.
    params = fuse_params(w, b, w0, b0, rows_packed=8)

    out = jax.block_until_ready(cosine_activation_fused(tau, params))
    ref = ref_fn(tau)
    assert out.shape == (batch, out_features), out.shape
    assert jnp.allclose(out, ref, atol=1e-4, rtol=1e-5), "mismatch vs reference"

    # Multi-tile + ragged last row-block (small block_rows override to exercise
    # the cdiv grid path cheaply): B=1000 -> 125 packed rows, tile of 8.
    tau_big = jax.random.normal(
        jax.random.PRNGKey(1), (1000, in_features), dtype=jnp.float32)
    out_big = jax.block_until_ready(
        cosine_activation_fused(tau_big, params, block_rows=64))
    assert out_big.shape == (1000, out_features), out_big.shape
    assert jnp.allclose(out_big, ref_fn(tau_big), atol=1e-4, rtol=1e-5), \
        "ragged-tile mismatch vs reference"

    # Batch not a multiple of the lane-packing factor (exercises the small
    # pad-to-multiple-of-R path and the trailing slice).
    tau_odd = jax.random.normal(
        jax.random.PRNGKey(2), (1003, in_features), dtype=jnp.float32)
    out_odd = jax.block_until_ready(cosine_activation_fused(tau_odd, params))
    assert out_odd.shape == (1003, out_features), out_odd.shape
    assert jnp.allclose(out_odd, ref_fn(tau_odd), atol=1e-4, rtol=1e-5), \
        "odd-batch mismatch vs reference"

    print("KERNEL_OK")
</pallas_src>

<mosaic_0001>
module attributes {stable_mosaic.version = 11 : i64} {
  func.func @_t2v_cos_kernel(%arg0: i32, %arg1: memref<1x256xf32, #tpu.memory_space<vmem>>, %arg2: memref<256x128xf32, #tpu.memory_space<vmem>>, %arg3: memref<1x128xf32, #tpu.memory_space<vmem>>, %arg4: memref<1x128xf32, #tpu.memory_space<vmem>>, %arg5: memref<1x128xf32, #tpu.memory_space<vmem>>) attributes {dimension_semantics = [#tpu.dimension_semantics<parallel>], iteration_bounds = array<i64: 1>, scalar_prefetch = 0 : i64, scratch_operands = 0 : i64, tpu.core_type = #tpu.core_type<tc>, window_params = [{transform_indices = @transform_0, window_bounds = array<i64: 1, 256>}, {pipeline_mode = #tpu.pipeline_mode<synchronous>, transform_indices = @transform_1, window_bounds = array<i64: 256, 128>}, {pipeline_mode = #tpu.pipeline_mode<synchronous>, transform_indices = @transform_2, window_bounds = array<i64: 1, 128>}, {pipeline_mode = #tpu.pipeline_mode<synchronous>, transform_indices = @transform_3, window_bounds = array<i64: 1, 128>}, {transform_indices = @transform_4, window_bounds = array<i64: 1, 128>}]} {
    %c0 = arith.constant 0 : index
    %c0_0 = arith.constant 0 : index
    %0 = vector.load %arg1[%c0, %c0_0] : memref<1x256xf32, #tpu.memory_space<vmem>>, vector<1x256xf32>
    %c0_1 = arith.constant 0 : index
    %c0_2 = arith.constant 0 : index
    %1 = vector.load %arg2[%c0_1, %c0_2] : memref<256x128xf32, #tpu.memory_space<vmem>>, vector<256x128xf32>
    %cst = arith.constant dense<0.000000e+00> : vector<1x128xf32>
    %2 = tpu.matmul %0, %1, %cst {dimension_numbers = #tpu.dot_dimension_numbers<[1], [0], [0], [1], [0, 0, 1, 1], [], []>} : vector<1x256xf32>, vector<256x128xf32>, vector<1x128xf32> -> vector<1x128xf32>
    %c0_3 = arith.constant 0 : index
    %c0_4 = arith.constant 0 : index
    %3 = vector.load %arg3[%c0_3, %c0_4] : memref<1x128xf32, #tpu.memory_space<vmem>>, vector<1x128xf32>
    %4 = arith.addf %2, %3 : vector<1x128xf32>
    %c0_5 = arith.constant 0 : index
    %c0_6 = arith.constant 0 : index
    %5 = vector.load %arg4[%c0_5, %c0_6] : memref<1x128xf32, #tpu.memory_space<vmem>>, vector<1x128xf32>
    %cst_7 = arith.constant 0.000000e+00 : f32
    %6 = vector.broadcast %cst_7 : f32 to vector<1x128xf32>
    %7 = arith.cmpf one, %5, %6 : vector<1x128xf32>
    %8 = math.cos %4 : vector<1x128xf32>
    %9 = arith.select %7, %8, %4 : vector<1x128xi1>, vector<1x128xf32>
    %c0_8 = arith.constant 0 : index
    %c0_9 = arith.constant 0 : index
    %10 = vector.load %arg5[%c0_8, %c0_9] : memref<1x128xf32, #tpu.memory_space<vmem>>, vector<1x128xf32>
    tpu.vector_store %arg5[%c0_8, %c0_9], %9 {strides = array<i32>} : memref<1x128xf32, #tpu.memory_space<vmem>>, vector<1x128xf32>,
    return
  }
  func.func @transform_0(%arg0: i32) -> (i32, i32) {
    %c0_i32 = arith.constant 0 : i32
    %c0_i32_0 = arith.constant 0 : i32
    return %arg0, %c0_i32 : i32, i32
  }
  func.func @transform_1(%arg0: i32) -> (i32, i32) {
    %c0_i32 = arith.constant 0 : i32
    %c0_i32_0 = arith.constant 0 : i32
    %c0_i32_1 = arith.constant 0 : i32
    return %c0_i32, %c0_i32_0 : i32, i32
  }
  func.func @transform_2(%arg0: i32) -> (i32, i32) {
    %c0_i32 = arith.constant 0 : i32
    %c0_i32_0 = arith.constant 0 : i32
    %c0_i32_1 = arith.constant 0 : i32
    return %c0_i32, %c0_i32_0 : i32, i32
  }
  func.func @transform_3(%arg0: i32) -> (i32, i32) {
    %c0_i32 = arith.constant 0 : i32
    %c0_i32_0 = arith.constant 0 : i32
    %c0_i32_1 = arith.constant 0 : i32
    return %c0_i32, %c0_i32_0 : i32, i32
  }
  func.func @transform_4(%arg0: i32) -> (i32, i32) {
    %c0_i32 = arith.constant 0 : i32
    %c0_i32_0 = arith.constant 0 : i32
    return %arg0, %c0_i32 : i32, i32
  }
}

</mosaic_0001>

<llo_original>
// kernel: tpu_custom_call.1
$region0: #{tpu_custom_call.1}
  #allocation0 [shape = 'u32[]', space=smem, size = 0x4, offset = 0x4, fixed_abs, tag = 'smem constant byte address 0x4 - core index']
  #allocation1 [shape = 'u32[72,128]{1,0:T(1,128)}', space=vmem, size = 0x9000, scoped, tag = 'internal scratch']
  %s0 = inlined_call_operand.hbm [shape: f32[1,256], index: 0, kind: input, shape index: {}]
  %s1 = inlined_call_operand.hbm [shape: f32[256,128], index: 1, kind: input, shape index: {}]
  %s2 = inlined_call_operand.vmem [shape: f32[1,128], index: 2, kind: input, shape index: {}]
  %s3 = inlined_call_operand.vmem [shape: f32[1,128], index: 3, kind: input, shape index: {}]
  %s4 = inlined_call_operand.hbm [shape: f32[1,128], index: 4, kind: output, shape index: {}]
  %s5 = sld [smem:[#allocation0]]
  $region34: #{tpu_custom_call.1} parent=0
    _
  %s7 = ssub.s32 1, %s5
  %s8 = scalar_select 0, %s7, %s5
  $region1: #{tpu_custom_call.1} parent=0
    #allocation2 [shape = 'u8[1024]{0}', space=vmem, size = 0x400, scoped, tag = 'input window, operand 0, single buffered']
    #allocation3 [shape = 's32[1]{0}', space=sflag, size = 0x4, scoped, tag = 'scoped memory for tpu_custom_call.1']
    #allocation4 [shape = 's32[1]{0}', space=sflag, size = 0x4, scoped, tag = 'scoped memory for tpu_custom_call.1']
    #allocation5 [shape = 'u8[131072]{0}', space=vmem, size = 0x20000, scoped, tag = 'input window, operand 1, single buffered']
    #allocation6 [shape = 's32[1]{0}', space=sflag, size = 0x4, scoped, tag = 'scoped memory for tpu_custom_call.1']
    #allocation7 [shape = 'u8[512]{0}', space=vmem, size = 0x400, scoped, tag = 'output window, operand 0, single buffered']
    %9 = vsyncpa [#allocation3], 0
    %10 = vsyncpa [#allocation6], 0
    %11 = vsyncpa [#allocation4], 0
    // Predicated region
    $region2: #{tpu_custom_call.1} parent=1 // pred_check
      _
    $region3: #{tpu_custom_call.1} parent=1 // pred_check_branch
      %13 = sbr.rel (0) target = $region5
    $region4: #{tpu_custom_call.1} parent=1 // pred_region
      %15 = vsyncadd [#allocation3], 0
      %s17 = sshll.u32 %s0, 4
      %s18 = int_to_ptr.hbm [resolvable:$true] %s17
      %s19 = sshll.u32 [#allocation2], 4
      %s20 = int_to_ptr.vmem [resolvable:$true] %s19
      %22 = dma.hbm_to_vmem [thread:$0]  %s18, 32, %s20, [#allocation3]
    $region5: #{tpu_custom_call.1} parent=1 // pred_fallthru
      _
    // Predicated region
    $region6: #{tpu_custom_call.1} parent=1 // pred_check
      _
    $region7: #{tpu_custom_call.1} parent=1 // pred_check_branch
      %24 = sbr.rel (0) target = $region9
    $region8: #{tpu_custom_call.1} parent=1 // pred_region
      %26 = vsyncadd [#allocation6], 0
      %s27 = sshll.u32 %s1, 4
      %s28 = int_to_ptr.hbm [resolvable:$true] %s27
      %s29 = sshll.u32 [#allocation5], 4
      %s30 = int_to_ptr.vmem [resolvable:$true] %s29
      %35 = dma.hbm_to_vmem [thread:$0]  %s28, 4096, %s30, [#allocation6], 128, 128, 8
    $region9: #{tpu_custom_call.1} parent=1 // pred_fallthru
      _
    // Predicated region
    $region10: #{tpu_custom_call.1} parent=1 // pred_check
      _
    $region11: #{tpu_custom_call.1} parent=1 // pred_check_branch
      %37 = sbr.rel (0) target = $region13
    $region12: #{tpu_custom_call.1} parent=1 // pred_region
      _
    $region13: #{tpu_custom_call.1} parent=1 // pred_fallthru
      _
    // Predicated region
    $region14: #{tpu_custom_call.1} parent=1 // pred_check
      _
    $region15: #{tpu_custom_call.1} parent=1 // pred_check_branch
      %39 = sbr.rel (0) target = $region17
    $region16: #{tpu_custom_call.1} parent=1 // pred_region
      _
    $region17: #{tpu_custom_call.1} parent=1 // pred_fallthru
      _
    // Predicated region
    $region18: #{tpu_custom_call.1} parent=1 // pred_check
      _
    $region19: #{tpu_custom_call.1} parent=1 // pred_check_branch
      %41 = sbr.rel (0) target = $region21
    $region20: #{tpu_custom_call.1} parent=1 // pred_region
      %43 = dma.done [#allocation3], 32
    $region21: #{tpu_custom_call.1} parent=1 // pred_fallthru
      _
    // Predicated region
    $region22: #{tpu_custom_call.1} parent=1 // pred_check
      _
    $region23: #{tpu_custom_call.1} parent=1 // pred_check_branch
      %45 = sbr.rel (0) target = $region25
    $region24: #{tpu_custom_call.1} parent=1 // pred_region
      %47 = dma.done [#allocation6], 4096
    $region25: #{tpu_custom_call.1} parent=1 // pred_fallthru
      _
    %v48 = vld [vmem:[#allocation2] sm:$0x3]
    %v49 = vld [vmem:[#allocation5] sm:$0xff]
    %v50 = vld [vmem:[#allocation5 + $0x8] sm:$0xff]
    %v51 = vld [vmem:[#allocation5 + $0x10] sm:$0xff]
    %v52 = vld [vmem:[#allocation5 + $0x18] sm:$0xff]
    %v53 = vld [vmem:[#allocation5 + $0x20] sm:$0xff]
    %v54 = vld [vmem:[#allocation5 + $0x28] sm:$0xff]
    %v55 = vld [vmem:[#allocation5 + $0x30] sm:$0xff]
    %v56 = vld [vmem:[#allocation5 + $0x38] sm:$0xff]
    %v57 = vld [vmem:[#allocation5 + $0x40] sm:$0xff]
    %v58 = vld [vmem:[#allocation5 + $0x48] sm:$0xff]
    %v59 = vld [vmem:[#allocation5 + $0x50] sm:$0xff]
    %v60 = vld [vmem:[#allocation5 + $0x58] sm:$0xff]
    %v61 = vld [vmem:[#allocation5 + $0x60] sm:$0xff]
    %v62 = vld [vmem:[#allocation5 + $0x68] sm:$0xff]
    %v63 = vld [vmem:[#allocation5 + $0x70] sm:$0xff]
    %v64 = vld [vmem:[#allocation5 + $0x78] sm:$0xff]
    %v65 = vld [vmem:[#allocation5 + $0x80] sm:$0xff]
    %v66 = vld [vmem:[#allocation5 + $0x88] sm:$0xff]
    %v67 = vld [vmem:[#allocation5 + $0x90] sm:$0xff]
    %v68 = vld [vmem:[#allocation5 + $0x98] sm:$0xff]
    %v69 = vld [vmem:[#allocation5 + $0xa0] sm:$0xff]
    %v70 = vld [vmem:[#allocation5 + $0xa8] sm:$0xff]
    %v71 = vld [vmem:[#allocation5 + $0xb0] sm:$0xff]
    %v72 = vld [vmem:[#allocation5 + $0xb8] sm:$0xff]
    %v73 = vld [vmem:[#allocation5 + $0xc0] sm:$0xff]
    %v74 = vld [vmem:[#allocation5 + $0xc8] sm:$0xff]
    %v75 = vld [vmem:[#allocation5 + $0xd0] sm:$0xff]
    %v76 = vld [vmem:[#allocation5 + $0xd8] sm:$0xff]
    %v77 = vld [vmem:[#allocation5 + $0xe0] sm:$0xff]
    %v78 = vld [vmem:[#allocation5 + $0xe8] sm:$0xff]
    %v79 = vld [vmem:[#allocation5 + $0xf0] sm:$0xff]
    %v80 = vld [vmem:[#allocation5 + $0xf8] sm:$0xff]
    %v81 = vld [vmem:[%s2] sm:$0x1]
    %v83 = vperm.slane %v48, 0
    %v84 = vperm.slane %v48, 1
    %87 = vmatpush.msra.mxu0 %v64
    %88 = vmatpush.msra.mxu0 %v63
    %89 = vmatpush.msra.mxu0 %v62
    %90 = vmatpush.msra.mxu0 %v61
    %91 = vmatpush.msra.mxu0 %v60
    %92 = vmatpush.msra.mxu0 %v59
    %93 = vmatpush.msra.mxu0 %v58
    %94 = vmatpush.msra.mxu0 %v57
    %95 = vmatpush.msra.mxu0 %v56
    %96 = vmatpush.msra.mxu0 %v55
    %97 = vmatpush.msra.mxu0 %v54
    %98 = vmatpush.msra.mxu0 %v53
    %99 = vmatpush.msra.mxu0 %v52
    %100 = vmatpush.msra.mxu0 %v51
    %101 = vmatpush.msra.mxu0 %v50
    %102 = vmatpush.msra.mxu0 %v49
    %103 = vmatmul.f32.gmra.mxu0 %v83
    %v104 = vpop.f32.mrf.mxu0
    %v105 = vadd.f32 %v81, %v104
    %106 = vdwg.mxu0
    %107 = vmatpush.msra.mxu0 %v80
    %108 = vmatpush.msra.mxu0 %v79
    %109 = vmatpush.msra.mxu0 %v78
    %110 = vmatpush.msra.mxu0 %v77
    %111 = vmatpush.msra.mxu0 %v76
    %112 = vmatpush.msra.mxu0 %v75
    %113 = vmatpush.msra.mxu0 %v74
    %114 = vmatpush.msra.mxu0 %v73
    %115 = vmatpush.msra.mxu0 %v72
    %116 = vmatpush.msra.mxu0 %v71
    %117 = vmatpush.msra.mxu0 %v70
    %118 = vmatpush.msra.mxu0 %v69
    %119 = vmatpush.msra.mxu0 %v68
    %120 = vmatpush.msra.mxu0 %v67
    %121 = vmatpush.msra.mxu0 %v66
    %122 = vmatpush.msra.mxu0 %v65
    %123 = vmatmul.f32.gmra.mxu0 %v84
    %v124 = vpop.f32.mrf.mxu0
    %v125 = vadd.f32 %v105, %v124
    %126 = vdwg.mxu0
    %v127 = vld [vmem:[%s3] sm:$0x1]
    %vm128 = vcmp.ne.f32.partialorder %v127, 0.0
    %v129 = vand.u32 2147483647, %v125
    %vm130 = vcmp.le.f32.partialorder %v129, 0.7853982
    %vm131 = vcmp.lt.s32.totalorder %v125, 0
    %v132 = vand.u32 %v125, 2139095040
    %v133 = vshrl.u32 %v132, 23
    %v134 = vsub.s32 %v133, 127
    %v135 = vand.u32 2147483647, %v125
    %v136 = vand.u32 %v135, 8388607
    %v137 = vor.u32 %v136, 8388608
    %v138 = vsub.s32 0, %v137
    %v139 = vadd.s32 %v134, 1
    %vm140 = vcmp.gt.s32.totalorder %v139, 0
    %v141 = vsel %vm140, %v139, 0
    %v142 = vshrl.u32 %v141, 5
    %v143 = vand.u32 %v141, 31
    %v144 = vsub.s32 32, %v143
    %v145 = vshrl.u32 683565275, %v144
    %v146 = vshll.u32 683565275, %v143
    %v147 = vshrl.u32 2475754826, %v144
    %v148 = vor.u32 %v146, %v147
    %v149 = vshll.u32 2475754826, %v143
    %v150 = vshrl.u32 2131351028, %v144
    %v151 = vor.u32 %v149, %v150
    %v152 = vshll.u32 2131351028, %v143
    %v153 = vshrl.u32 2102212464, %v144
    %v154 = vor.u32 %v152, %v153
    %v155 = vshll.u32 2102212464, %v143
    %v156 = vshrl.u32 920167782, %v144
    %v157 = vor.u32 %v155, %v156
    %v158 = vshll.u32 920167782, %v143
    %v159 = vshrl.u32 1326507024, %v144
    %v160 = vor.u32 %v158, %v159
    %vm161 = vcmp.lt.s32.totalorder %v142, 1
    %vm162 = vcmp.lt.s32.totalorder %v142, 2
    %vm163 = vcmp.lt.s32.totalorder %v142, 3
    %vm164 = vcmp.lt.s32.totalorder %v142, 4
    %v165 = vsel %vm161, %v145, %v148
    %v166 = vsel %vm164, %v154, 2102212464
    %v167 = vsel %vm163, %v151, %v166
    %v168 = vsel %vm162, %v165, %v167
    %v169 = vsel %vm161, %v148, %v151
    %v170 = vsel %vm164, %v157, 920167782
    %v171 = vsel %vm163, %v154, %v170
    %v172 = vsel %vm162, %v169, %v171
    %v173 = vsel %vm161, %v151, %v154
    %v174 = vsel %vm164, %v160, 1326507024
    %v175 = vsel %vm163, %v157, %v174
    %v176 = vsel %vm162, %v173, %v175
    %v177 = vshll.u32 %v137, 8
    %v178 = vand.u32 %v177, 65535
    %v179 = vshrl.u32 %v177, 16
    %v180 = vand.u32 %v176, 65535
    %v181 = vshrl.u32 %v176, 16
    %v182 = vmul.u32 %v178, %v180
    %v183 = vmul.u32 %v178, %v181
    %v184 = vmul.u32 %v179, %v180
    %v185 = vmul.u32 %v179, %v181
    %v186 = vshll.u32 %v183, 16
    %v187 = vshrl.u32 %v183, 16
    %v188 = vshll.u32 %v184, 16
    %v189 = vshrl.u32 %v184, 16
    %vm190 = vc.u32 %v182, %v186
    %v191 = vsel %vm190, 1, 0
    %v192 = vadd.s32 %v182, %v186
    %v193 = vadd.s32 %v185, %v191
    %vm194 = vc.u32 %v192, %v188
    %v195 = vsel %vm194, 1, 0
    %v196 = vadd.s32 %v192, %v188
    %v197 = vadd.s32 %v193, %v195
    %v198 = vadd.s32 %v197, %v187
    %v199 = vadd.s32 %v198, %v189
    %v200 = vand.u32 %v177, 65535
    %v201 = vshrl.u32 %v177, 16
    %v202 = vand.u32 %v172, 65535
    %v203 = vshrl.u32 %v172, 16
    %v204 = vmul.u32 %v200, %v202
    %v205 = vmul.u32 %v200, %v203
    %v206 = vmul.u32 %v201, %v202
    %v207 = vmul.u32 %v201, %v203
    %v208 = vshll.u32 %v205, 16
    %v209 = vshrl.u32 %v205, 16
    %v210 = vshll.u32 %v206, 16
    %v211 = vshrl.u32 %v206, 16
    %vm212 = vc.u32 %v204, %v208
    %v213 = vsel %vm212, 1, 0
    %v214 = vadd.s32 %v204, %v208
    %v215 = vadd.s32 %v207, %v213
    %vm216 = vc.u32 %v214, %v210
    %v217 = vsel %vm216, 1, 0
    %v218 = vadd.s32 %v214, %v210
    %v219 = vadd.s32 %v215, %v217
    %v220 = vadd.s32 %v219, %v209
    %v221 = vadd.s32 %v220, %v211
    %v222 = vmul.u32 %v177, %v168
    %v223 = vadd.s32 %v199, %v218
    %vm224 = vc.u32 %v199, %v218
    %v225 = vadd.s32 %v221, 1
    %v226 = vsel %vm224, %v225, %v221
    %v227 = vadd.s32 %v222, %v226
    %v228 = vadd.s32 %v227, 536870912
    %v229 = vshrl.u32 %v228, 30
    %v230 = vshll.u32 %v229, 30
    %v231 = vsub.s32 %v227, %v230
    %vm232 = vcmp.lt.s32.totalorder %v231, 0
    %v233 = vsub.s32 0, %v231
    %v234 = vsel %vm232, %v233, %v231
    %v235 = vclz %v234
    %v236 = vsub.s32 %v235, 2
    %vm237 = vcmp.gt.s32.totalorder 0, %v236
    %v238 = vsel %vm237, 0, %v236
    %v239 = vsub.s32 32, %v238
    %v240 = vshll.u32 %v231, %v238
    %v241 = vshrl.u32 %v223, %v239
    %v242 = vor.u32 %v240, %v241
    %v243 = vsub.s32 4294967266, %v238
    %v244 = vadd.s32 %v243, 127
    %v245 = vshll.u32 %v244, 23
    %v246 = vor.u32 4788187, %v245
    %v247 = vand.u32 2147483647, %v246
    %v249 = vcvt.s32.f32 %v242
    %v250 = vmul.f32 %v249, %v247
    %v251 = vxor.u32 %v250, 2147483648
    %v252 = vsel %vm131, %v251, %v250
    %v253 = vsub.s32 4, %v229
    %v254 = vsel %vm131, %v253, %v229
    %v255 = vsel %vm130, %v125, %v252
    %v256 = vsel %vm130, 0, %v254
    %v257 = vmul.f32 %v255, %v255
    %v258 = vmul.f32 %v257, -0.001358992
    %v259 = vadd.f32 %v258, 0.041655596
    %v260 = vmul.f32 %v257, %v259
    %v261 = vadd.f32 %v260, -0.4999988
    %v262 = vmul.f32 %v257, %v261
    %v263 = vadd.f32 1.0, %v262
    %v264 = vmul.f32 %v255, %v255
    %v265 = vmul.f32 %v264, -0.00019511016
    %v266 = vadd.f32 %v265, 0.008332121
    %v267 = vmul.f32 %v264, %v266
    %v268 = vadd.f32 %v267, -0.16666654
    %v269 = vmul.f32 %v264, %v268
    %v270 = vadd.f32 %v269, 1.0
    %v271 = vmul.f32 %v270, %v255
    %vm272 = vweird.f32 %v125
    %v273 = vand.u32 %v256, 3
    %vm274 = vcmp.lt.s32.totalorder %v273, 2
    %vm275 = vcmp.eq.s32.totalorder %v273, 0
    %v276 = vxor.u32 %v271, 2147483648
    %v277 = vsel %vm275, %v263, %v276
    %vm278 = vcmp.eq.s32.totalorder %v273, 2
    %v279 = vxor.u32 %v263, 2147483648
    %v280 = vsel %vm278, %v279, %v271
    %v281 = vsel %vm274, %v277, %v280
    %v282 = vsel %vm272, nan, %v281
    %v283 = vsel %vm128, %v282, %v125
    %284 = vst [vmem:[#allocation7] sm:$0x1] %v283
    // Predicated region
    $region26: #{tpu_custom_call.1} parent=1 // pred_check
      _
    $region27: #{tpu_custom_call.1} parent=1 // pred_check_branch
      %286 = sbr.rel (0) target = $region29
    $region28: #{tpu_custom_call.1} parent=1 // pred_region
      %288 = vsyncadd [#allocation4], 0
      %s290 = sshll.u32 [#allocation7], 4
      %s291 = int_to_ptr.vmem [resolvable:$true] %s290
      %s292 = sshll.u32 %s4, 4
      %s293 = int_to_ptr.hbm [resolvable:$true] %s292
      %295 = dma.vmem_to_hbm [thread:$0]  %s291, 16, %s293, [#allocation4]
    $region29: #{tpu_custom_call.1} parent=1 // pred_fallthru
      _
    // Predicated region
    $region30: #{tpu_custom_call.1} parent=1 // pred_check
      _
    $region31: #{tpu_custom_call.1} parent=1 // pred_check_branch
      %297 = sbr.rel (0) target = $region33
    $region32: #{tpu_custom_call.1} parent=1 // pred_region
      %299 = dma.done [#allocation4], 16
    $region33: #{tpu_custom_call.1} parent=1 // pred_fallthru
      _
    %300 = vsyncpa [#allocation3], 1
    %301 = vsyncpa [#allocation6], 1
    %302 = vsyncpa [#allocation4], 1

</llo_original>
